<compile_context>
chip_gen: v5e
topology: v5e:2x2
jax: 0.10.0
libtpu: 0.0.40
codegen_flags: <defaults>
</compile_context>

<pallas_src>
import jax
import jax.numpy as jnp
from jax.experimental import pallas as pl
from jax.experimental.pallas import tpu as pltpu


def _round_up(n, m):
    return ((n + m - 1) // m) * m


def _cdiv(a, b):
    return (a + b - 1) // b


def critic_kernel(x_ref, w1_ref, b1_ref, w2_ref, b2_ref, w3t_ref, b3_ref, o_ref):
    # x tile: [TB, s_dim]; weights are full arrays (VMEM-resident across the grid).
    x = x_ref[...]

    # linear1 + relu  (MXU matmul, f32 accumulate)
    h1 = jnp.dot(x, w1_ref[...], preferred_element_type=jnp.float32) + b1_ref[...]
    h1 = jnp.maximum(h1, 0.0)

    # linear2 + relu
    h2 = jnp.dot(h1, w2_ref[...], preferred_element_type=jnp.float32) + b2_ref[...]
    h2 = jnp.maximum(h2, 0.0)

    # linear3 (out_features = 1): VPU multiply + lane reduction instead of a padded
    # N=1 MXU matmul.  w3t is the weight row [1, h_dim]; b3 is an SMEM scalar.
    # The per-row sums are relaid to the lane dim so the store is lane-dense (1, TB).
    v = jnp.sum(h2 * w3t_ref[...], axis=-1) + b3_ref[0, 0]        # (TB,)
    o_ref[...] = v[None, :].astype(o_ref.dtype)                    # (1, TB) lane-dense


def critic_forward(x, params, *, tb=None, vmem_budget_bytes=24 * 1024 * 1024):
    """x: [B, s_dim]. params: dict with w1,b1,w2,b2,w3t,b3. Returns [B, 1]."""
    w1, b1 = params["w1"], params["b1"]
    w2, b2 = params["w2"], params["b2"]
    w3t, b3 = params["w3t"], params["b3"]

    B, s_dim = x.shape
    h_dim = w1.shape[1]

    # --- batch-tile selection ------------------------------------------------
    # Resident weights are double-buffered by the pipeline even with constant
    # index_maps; per-row traffic (x row + one output element) is double-buffered.
    # TODO(synk): if h_dim grows to >=1024, switch the weight BlockSpecs to
    # pipeline_mode=pl.Buffered(1) (or a one-time manual DMA) to stop w2 from
    # being double-buffered and shrinking the achievable batch tile on v7x.
    weight_bytes = 2 * 4 * (s_dim * h_dim + h_dim * h_dim + 3 * h_dim)
    row_bytes = 2 * 4 * (s_dim + 1)
    tb_max = (vmem_budget_bytes - weight_bytes) // row_bytes
    tb_max = max(128, min(8192, (tb_max // 128) * 128))

    if tb is None:
        # Multiple of 128 (lane-dense output tile), capped at 2048, and small
        # enough that the grid has >= 2 steps when B allows it (v7x megacore).
        tb = min(tb_max, 2048, _round_up(_cdiv(B, 2), 128))
    tb = max(128, _round_up(tb, 128))
    tb = min(tb, tb_max)

    num_tiles = _cdiv(B, tb)   # boundary block padded by Pallas; no jnp.pad of x
    Bp = num_tiles * tb

    def resident(arr):
        # Full-array block with a constant index_map -> DMA'd once, VMEM-resident.
        return pl.BlockSpec(arr.shape, lambda i, _nd=arr.ndim: (0,) * _nd)

    flops = 2 * B * (s_dim * h_dim + h_dim * h_dim + h_dim)
    bytes_accessed = 4 * (B * s_dim + B + s_dim * h_dim + h_dim * h_dim + 3 * h_dim + 1)
    cost = pl.CostEstimate(flops=flops, transcendentals=0, bytes_accessed=bytes_accessed)

    out = pl.pallas_call(
        critic_kernel,
        out_shape=jax.ShapeDtypeStruct((1, Bp), x.dtype),          # lane-dense output
        grid=(num_tiles,),
        in_specs=[
            pl.BlockSpec((tb, s_dim), lambda i: (i, 0)),           # x tile (batch grid)
            resident(w1), resident(b1),                            # linear1
            resident(w2), resident(b2),                            # linear2
            resident(w3t),                                         # linear3 weight row
            pl.BlockSpec(memory_space=pltpu.MemorySpace.SMEM),     # b3 scalar
        ],
        out_specs=pl.BlockSpec((1, tb), lambda i: (0, i)),
        compiler_params=pltpu.CompilerParams(
            dimension_semantics=("parallel",),
            vmem_limit_bytes=32 * 1024 * 1024,
        ),
        cost_estimate=cost,
    )(x, w1, b1, w2, b2, w3t, b3)

    # Drop the (independent, discarded) rows from the padded boundary block.
    return out[0, :B][:, None]


def init_critic_params(key, s_dim, h_dim, dtype=jnp.float32):
    """Mimics nn.Linear default init (U[-1/sqrt(fan_in), 1/sqrt(fan_in)]).
    Weights stored [in, out]; the last layer's weight is stored as a row [1, h_dim]."""
    k = jax.random.split(key, 6)

    def lin(kw, kb, fan_in, shape_w, shape_b):
        bound = 1.0 / jnp.sqrt(jnp.float32(fan_in))
        w = jax.random.uniform(kw, shape_w, jnp.float32, -bound, bound).astype(dtype)
        b = jax.random.uniform(kb, shape_b, jnp.float32, -bound, bound).astype(dtype)
        return w, b

    w1, b1 = lin(k[0], k[1], s_dim, (s_dim, h_dim), (1, h_dim))
    w2, b2 = lin(k[2], k[3], h_dim, (h_dim, h_dim), (1, h_dim))
    w3t, b3 = lin(k[4], k[5], h_dim, (1, h_dim), (1, 1))
    return {"w1": w1, "b1": b1, "w2": w2, "b2": b2, "w3t": w3t, "b3": b3}


def critic_ref(x, params):
    """Plain-JAX reference (matches the PyTorch forward)."""
    h1 = jnp.maximum(x @ params["w1"] + params["b1"], 0.0)
    h2 = jnp.maximum(h1 @ params["w2"] + params["b2"], 0.0)
    return h2 @ params["w3t"].T + params["b3"]


if __name__ == "__main__":
    key = jax.random.PRNGKey(0)
    k_x, k_x2, k_p = jax.random.split(key, 3)

    # Small shapes consistent with Critic(s_dim, a_dim, h_dim)
    s_dim, h_dim = 16, 32
    params = init_critic_params(k_p, s_dim, h_dim)

    # Case 1: tiny batch (single padded boundary block, lane-dense (1, tb) store).
    B = 8
    x = jax.random.normal(k_x, (B, s_dim), jnp.float32)
    out = jax.block_until_ready(critic_forward(x, params))
    ref = critic_ref(x, params)
    assert out.shape == (B, 1)
    assert jnp.allclose(out, ref, atol=1e-5, rtol=1e-5)

    # Case 2: larger, non-multiple batch exercising the batch grid (3 steps of 128),
    # the padded boundary block (no jnp.pad of x), and "parallel" semantics.
    B2 = 300
    x2 = jax.random.normal(k_x2, (B2, s_dim), jnp.float32)
    out2 = jax.block_until_ready(critic_forward(x2, params, tb=128))
    ref2 = critic_ref(x2, params)
    assert out2.shape == (B2, 1)
    assert jnp.allclose(out2, ref2, atol=1e-5, rtol=1e-5)

    print("KERNEL_OK")
</pallas_src>

<mosaic_0001>
module attributes {stable_mosaic.version = 11 : i64} {
  func.func @critic_kernel(%arg0: i32, %arg1: memref<128x16xf32, #tpu.memory_space<vmem>>, %arg2: memref<16x32xf32, #tpu.memory_space<vmem>>, %arg3: memref<1x32xf32, #tpu.memory_space<vmem>>, %arg4: memref<32x32xf32, #tpu.memory_space<vmem>>, %arg5: memref<1x32xf32, #tpu.memory_space<vmem>>, %arg6: memref<1x32xf32, #tpu.memory_space<vmem>>, %arg7: memref<1x1xf32, #tpu.memory_space<smem>>, %arg8: memref<1x128xf32, #tpu.memory_space<vmem>>) attributes {dimension_semantics = [#tpu.dimension_semantics<parallel>], iteration_bounds = array<i64: 1>, scalar_prefetch = 0 : i64, scratch_operands = 0 : i64, tpu.core_type = #tpu.core_type<tc>, window_params = [{transform_indices = @transform_0, window_bounds = array<i64: 128, 16>}, {pipeline_mode = #tpu.pipeline_mode<synchronous>, transform_indices = @transform_1, window_bounds = array<i64: 16, 32>}, {pipeline_mode = #tpu.pipeline_mode<synchronous>, transform_indices = @transform_2, window_bounds = array<i64: 1, 32>}, {pipeline_mode = #tpu.pipeline_mode<synchronous>, transform_indices = @transform_3, window_bounds = array<i64: 32, 32>}, {pipeline_mode = #tpu.pipeline_mode<synchronous>, transform_indices = @transform_4, window_bounds = array<i64: 1, 32>}, {pipeline_mode = #tpu.pipeline_mode<synchronous>, transform_indices = @transform_5, window_bounds = array<i64: 1, 32>}, {transform_indices = @transform_6, window_bounds = array<i64: 1, 1>}, {transform_indices = @transform_7, window_bounds = array<i64: 1, 128>}]} {
    %c0 = arith.constant 0 : index
    %c0_0 = arith.constant 0 : index
    %0 = vector.load %arg1[%c0, %c0_0] : memref<128x16xf32, #tpu.memory_space<vmem>>, vector<128x16xf32>
    %c0_1 = arith.constant 0 : index
    %c0_2 = arith.constant 0 : index
    %1 = vector.load %arg2[%c0_1, %c0_2] : memref<16x32xf32, #tpu.memory_space<vmem>>, vector<16x32xf32>
    %cst = arith.constant dense<0.000000e+00> : vector<128x32xf32>
    %2 = tpu.matmul %0, %1, %cst {dimension_numbers = #tpu.dot_dimension_numbers<[1], [0], [0], [1], [0, 0, 1, 1], [], []>} : vector<128x16xf32>, vector<16x32xf32>, vector<128x32xf32> -> vector<128x32xf32>
    %c0_3 = arith.constant 0 : index
    %c0_4 = arith.constant 0 : index
    %3 = vector.load %arg3[%c0_3, %c0_4] : memref<1x32xf32, #tpu.memory_space<vmem>>, vector<1x32xf32>
    %4 = vector.broadcast %3 : vector<1x32xf32> to vector<128x32xf32>
    %5 = arith.addf %2, %4 : vector<128x32xf32>
    %cst_5 = arith.constant 0.000000e+00 : f32
    %6 = vector.broadcast %cst_5 : f32 to vector<128x32xf32>
    %7 = arith.maximumf %5, %6 : vector<128x32xf32>
    %c0_6 = arith.constant 0 : index
    %c0_7 = arith.constant 0 : index
    %8 = vector.load %arg4[%c0_6, %c0_7] : memref<32x32xf32, #tpu.memory_space<vmem>>, vector<32x32xf32>
    %cst_8 = arith.constant dense<0.000000e+00> : vector<128x32xf32>
    %9 = tpu.matmul %7, %8, %cst_8 {dimension_numbers = #tpu.dot_dimension_numbers<[1], [0], [0], [1], [0, 0, 1, 1], [], []>} : vector<128x32xf32>, vector<32x32xf32>, vector<128x32xf32> -> vector<128x32xf32>
    %c0_9 = arith.constant 0 : index
    %c0_10 = arith.constant 0 : index
    %10 = vector.load %arg5[%c0_9, %c0_10] : memref<1x32xf32, #tpu.memory_space<vmem>>, vector<1x32xf32>
    %11 = vector.broadcast %10 : vector<1x32xf32> to vector<128x32xf32>
    %12 = arith.addf %9, %11 : vector<128x32xf32>
    %cst_11 = arith.constant 0.000000e+00 : f32
    %13 = vector.broadcast %cst_11 : f32 to vector<128x32xf32>
    %14 = arith.maximumf %12, %13 : vector<128x32xf32>
    %c0_12 = arith.constant 0 : index
    %c0_13 = arith.constant 0 : index
    %15 = vector.load %arg6[%c0_12, %c0_13] : memref<1x32xf32, #tpu.memory_space<vmem>>, vector<1x32xf32>
    %16 = vector.broadcast %15 : vector<1x32xf32> to vector<128x32xf32>
    %17 = arith.mulf %14, %16 : vector<128x32xf32>
    %cst_14 = arith.constant dense<0.000000e+00> : vector<128xf32>
    %18 = vector.multi_reduction <add>, %17, %cst_14 [1] : vector<128x32xf32> to vector<128xf32>
    %c0_15 = arith.constant 0 : index
    %c0_16 = arith.constant 0 : index
    %19 = memref.load %arg7[%c0_15, %c0_16] : memref<1x1xf32, #tpu.memory_space<smem>>
    %20 = vector.broadcast %19 : f32 to vector<128xf32>
    %21 = arith.addf %18, %20 : vector<128xf32>
    %22 = vector.shape_cast %21 : vector<128xf32> to vector<1x128xf32>
    %c0_17 = arith.constant 0 : index
    %c0_18 = arith.constant 0 : index
    %23 = vector.load %arg8[%c0_17, %c0_18] : memref<1x128xf32, #tpu.memory_space<vmem>>, vector<1x128xf32>
    tpu.vector_store %arg8[%c0_17, %c0_18], %22 {strides = array<i32>} : memref<1x128xf32, #tpu.memory_space<vmem>>, vector<1x128xf32>,
    return
  }
  func.func @transform_0(%arg0: i32) -> (i32, i32) {
    %c0_i32 = arith.constant 0 : i32
    %c0_i32_0 = arith.constant 0 : i32
    return %arg0, %c0_i32 : i32, i32
  }
  func.func @transform_1(%arg0: i32) -> (i32, i32) {
    %c0_i32 = arith.constant 0 : i32
    %c0_i32_0 = arith.constant 0 : i32
    %c0_i32_1 = arith.constant 0 : i32
    return %c0_i32, %c0_i32_0 : i32, i32
  }
  func.func @transform_2(%arg0: i32) -> (i32, i32) {
    %c0_i32 = arith.constant 0 : i32
    %c0_i32_0 = arith.constant 0 : i32
    %c0_i32_1 = arith.constant 0 : i32
    return %c0_i32, %c0_i32_0 : i32, i32
  }
  func.func @transform_3(%arg0: i32) -> (i32, i32) {
    %c0_i32 = arith.constant 0 : i32
    %c0_i32_0 = arith.constant 0 : i32
    %c0_i32_1 = arith.constant 0 : i32
    return %c0_i32, %c0_i32_0 : i32, i32
  }
  func.func @transform_4(%arg0: i32) -> (i32, i32) {
    %c0_i32 = arith.constant 0 : i32
    %c0_i32_0 = arith.constant 0 : i32
    %c0_i32_1 = arith.constant 0 : i32
    return %c0_i32, %c0_i32_0 : i32, i32
  }
  func.func @transform_5(%arg0: i32) -> (i32, i32) {
    %c0_i32 = arith.constant 0 : i32
    %c0_i32_0 = arith.constant 0 : i32
    %c0_i32_1 = arith.constant 0 : i32
    return %c0_i32, %c0_i32_0 : i32, i32
  }
  func.func @transform_6(%arg0: i32) -> (i32, i32) {
    %c0_i32 = arith.constant 0 : i32
    %c0_i32_0 = arith.constant 0 : i32
    %c0_i32_1 = arith.constant 0 : i32
    return %c0_i32, %c0_i32_0 : i32, i32
  }
  func.func @transform_7(%arg0: i32) -> (i32, i32) {
    %c0_i32 = arith.constant 0 : i32
    %c0_i32_0 = arith.constant 0 : i32
    return %c0_i32, %arg0 : i32, i32
  }
}

</mosaic_0001>

<llo_original>
// kernel: tpu_custom_call.1
$region0: #{tpu_custom_call.1}
  #allocation0 [shape = 'u32[]', space=smem, size = 0x4, offset = 0x4, fixed_abs, tag = 'smem constant byte address 0x4 - core index']
  #allocation1 [shape = 'u32[72,128]{1,0:T(1,128)}', space=vmem, size = 0x9000, scoped, tag = 'internal scratch']
  #allocation2 [shape = 'f32[1,1]{1,0:T(1,128)S(6)}', space=smem, size = 0x200, scoped, tag = 'scoped memory for tpu_custom_call.1']
  %s0 = inlined_call_operand.hbm [shape: f32[8,16], index: 0, kind: input, shape index: {}]
  %s1 = inlined_call_operand.hbm [shape: f32[16,32], index: 1, kind: input, shape index: {}]
  %s2 = inlined_call_operand.vmem [shape: f32[1,32], index: 2, kind: input, shape index: {}]
  %s3 = inlined_call_operand.hbm [shape: f32[32,32], index: 3, kind: input, shape index: {}]
  %s4 = inlined_call_operand.vmem [shape: f32[1,32], index: 4, kind: input, shape index: {}]
  %s5 = inlined_call_operand.vmem [shape: f32[1,32], index: 5, kind: input, shape index: {}]
  %s6 = inlined_call_operand.<no memory space> [shape: f32[1,1], index: 6, kind: input, shape index: {}]
  %s7 = inlined_call_operand.hbm [shape: f32[1,128], index: 7, kind: output, shape index: {}]
  %s8 = sld [smem:[#allocation0]]
  $region50: #{tpu_custom_call.1} parent=0
    _
  %s10 = ssub.s32 1, %s8
  %s11 = scalar_select 0, %s10, %s8
  %12 = sst [smem:[#allocation2]] %s6
  $region1: #{tpu_custom_call.1} parent=0
    #allocation3 [shape = 'u8[65536]{0}', space=vmem, size = 0x10000, scoped, tag = 'input window, operand 0, single buffered']
    #allocation4 [shape = 's32[1]{0}', space=sflag, size = 0x4, scoped, tag = 'scoped memory for tpu_custom_call.1']
    #allocation5 [shape = 's32[1]{0}', space=sflag, size = 0x4, scoped, tag = 'scoped memory for tpu_custom_call.1']
    #allocation6 [shape = 'u8[8192]{0}', space=vmem, size = 0x2000, scoped, tag = 'input window, operand 1, single buffered']
    #allocation7 [shape = 's32[1]{0}', space=sflag, size = 0x4, scoped, tag = 'scoped memory for tpu_custom_call.1']
    #allocation8 [shape = 'u8[16384]{0}', space=vmem, size = 0x4000, scoped, tag = 'input window, operand 3, single buffered']
    #allocation9 [shape = 'u8[512]{0}', space=vmem, size = 0x400, scoped, tag = 'output window, operand 0, single buffered']
    %13 = vsyncpa [#allocation4], 0
    %14 = vsyncpa [#allocation7], 0
    %15 = vsyncpa [#allocation5], 0
    // Predicated region
    $region2: #{tpu_custom_call.1} parent=1 // pred_check
      _
    $region3: #{tpu_custom_call.1} parent=1 // pred_check_branch
      %17 = sbr.rel (0) target = $region5
    $region4: #{tpu_custom_call.1} parent=1 // pred_region
      %19 = vsyncadd [#allocation4], 1920
      %s20 = sshll.u32 %s0, 4
      %s21 = int_to_ptr.hbm [resolvable:$true] %s20
      %s22 = sshll.u32 [#allocation3], 4
      %s23 = int_to_ptr.vmem [resolvable:$true] %s22
      %28 = dma.hbm_to_vmem [thread:$0]  %s21, 128, %s23, [#allocation4], 128, 128, 8
    $region5: #{tpu_custom_call.1} parent=1 // pred_fallthru
      _
    // Predicated region
    $region6: #{tpu_custom_call.1} parent=1 // pred_check
      _
    $region7: #{tpu_custom_call.1} parent=1 // pred_check_branch
      %30 = sbr.rel (0) target = $region9
    $region8: #{tpu_custom_call.1} parent=1 // pred_region
      %32 = vsyncadd [#allocation7], 0
      %s33 = sshll.u32 %s1, 4
      %s34 = int_to_ptr.hbm [resolvable:$true] %s33
      %s35 = sshll.u32 [#allocation6], 4
      %s36 = int_to_ptr.vmem [resolvable:$true] %s35
      %41 = dma.hbm_to_vmem [thread:$0]  %s34, 256, %s36, [#allocation7], 128, 128, 8
    $region9: #{tpu_custom_call.1} parent=1 // pred_fallthru
      _
    // Predicated region
    $region10: #{tpu_custom_call.1} parent=1 // pred_check
      _
    $region11: #{tpu_custom_call.1} parent=1 // pred_check_branch
      %43 = sbr.rel (0) target = $region13
    $region12: #{tpu_custom_call.1} parent=1 // pred_region
      _
    $region13: #{tpu_custom_call.1} parent=1 // pred_fallthru
      _
    // Predicated region
    $region14: #{tpu_custom_call.1} parent=1 // pred_check
      _
    $region15: #{tpu_custom_call.1} parent=1 // pred_check_branch
      %45 = sbr.rel (0) target = $region17
    $region16: #{tpu_custom_call.1} parent=1 // pred_region
      %47 = vsyncadd [#allocation7], 0
      %s48 = sshll.u32 %s3, 4
      %s49 = int_to_ptr.hbm [resolvable:$true] %s48
      %s50 = sshll.u32 [#allocation8], 4
      %s51 = int_to_ptr.vmem [resolvable:$true] %s50
      %56 = dma.hbm_to_vmem [thread:$0]  %s49, 512, %s51, [#allocation7], 128, 128, 8
    $region17: #{tpu_custom_call.1} parent=1 // pred_fallthru
      _
    // Predicated region
    $region18: #{tpu_custom_call.1} parent=1 // pred_check
      _
    $region19: #{tpu_custom_call.1} parent=1 // pred_check_branch
      %58 = sbr.rel (0) target = $region21
    $region20: #{tpu_custom_call.1} parent=1 // pred_region
      _
    $region21: #{tpu_custom_call.1} parent=1 // pred_fallthru
      _
    // Predicated region
    $region22: #{tpu_custom_call.1} parent=1 // pred_check
      _
    $region23: #{tpu_custom_call.1} parent=1 // pred_check_branch
      %60 = sbr.rel (0) target = $region25
    $region24: #{tpu_custom_call.1} parent=1 // pred_region
      _
    $region25: #{tpu_custom_call.1} parent=1 // pred_fallthru
      _
    // Predicated region
    $region26: #{tpu_custom_call.1} parent=1 // pred_check
      _
    $region27: #{tpu_custom_call.1} parent=1 // pred_check_branch
      %62 = sbr.rel (0) target = $region29
    $region28: #{tpu_custom_call.1} parent=1 // pred_region
      _
    $region29: #{tpu_custom_call.1} parent=1 // pred_fallthru
      _
    // Predicated region
    $region30: #{tpu_custom_call.1} parent=1 // pred_check
      _
    $region31: #{tpu_custom_call.1} parent=1 // pred_check_branch
      %64 = sbr.rel (0) target = $region33
    $region32: #{tpu_custom_call.1} parent=1 // pred_region
      %66 = dma.done [#allocation4], 2048
    $region33: #{tpu_custom_call.1} parent=1 // pred_fallthru
      _
    // Predicated region
    $region34: #{tpu_custom_call.1} parent=1 // pred_check
      _
    $region35: #{tpu_custom_call.1} parent=1 // pred_check_branch
      %68 = sbr.rel (0) target = $region37
    $region36: #{tpu_custom_call.1} parent=1 // pred_region
      %70 = dma.done [#allocation7], 256
    $region37: #{tpu_custom_call.1} parent=1 // pred_fallthru
      _
    // Predicated region
    $region38: #{tpu_custom_call.1} parent=1 // pred_check
      _
    $region39: #{tpu_custom_call.1} parent=1 // pred_check_branch
      %72 = sbr.rel (0) target = $region41
    $region40: #{tpu_custom_call.1} parent=1 // pred_region
      %74 = dma.done [#allocation7], 512
    $region41: #{tpu_custom_call.1} parent=1 // pred_fallthru
      _
    %v75 = vld [vmem:[#allocation3] sm:$0xff]
    %v76 = vld [vmem:[#allocation3 + $0x8] sm:$0xff]
    %v77 = vld [vmem:[#allocation3 + $0x10] sm:$0xff]
    %v78 = vld [vmem:[#allocation3 + $0x18] sm:$0xff]
    %v79 = vld [vmem:[#allocation3 + $0x20] sm:$0xff]
    %v80 = vld [vmem:[#allocation3 + $0x28] sm:$0xff]
    %v81 = vld [vmem:[#allocation3 + $0x30] sm:$0xff]
    %v82 = vld [vmem:[#allocation3 + $0x38] sm:$0xff]
    %v83 = vld [vmem:[#allocation3 + $0x40] sm:$0xff]
    %v84 = vld [vmem:[#allocation3 + $0x48] sm:$0xff]
    %v85 = vld [vmem:[#allocation3 + $0x50] sm:$0xff]
    %v86 = vld [vmem:[#allocation3 + $0x58] sm:$0xff]
    %v87 = vld [vmem:[#allocation3 + $0x60] sm:$0xff]
    %v88 = vld [vmem:[#allocation3 + $0x68] sm:$0xff]
    %v89 = vld [vmem:[#allocation3 + $0x70] sm:$0xff]
    %v90 = vld [vmem:[#allocation3 + $0x78] sm:$0xff]
    %v91 = vld [vmem:[#allocation6] sm:$0xff]
    %v92 = vld [vmem:[#allocation6 + $0x8] sm:$0xff]
    %v93 = vld [vmem:[%s2] sm:$0x1]
    %v95 = vperm.slane %v93, 0
    %vm97 = vcmask 130048
    %v99 = vsel %vm97, %v75, 0
    %v102 = vsel %vm97, %v76, 0
    %v105 = vsel %vm97, %v77, 0
    %v108 = vsel %vm97, %v78, 0
    %v111 = vsel %vm97, %v79, 0
    %v114 = vsel %vm97, %v80, 0
    %v117 = vsel %vm97, %v81, 0
    %v120 = vsel %vm97, %v82, 0
    %v123 = vsel %vm97, %v83, 0
    %v126 = vsel %vm97, %v84, 0
    %v129 = vsel %vm97, %v85, 0
    %v132 = vsel %vm97, %v86, 0
    %v135 = vsel %vm97, %v87, 0
    %v138 = vsel %vm97, %v88, 0
    %v141 = vsel %vm97, %v89, 0
    %v144 = vsel %vm97, %v90, 0
    %146 = vmatpush.msra.mxu0 0.0
    %147 = vmatpush.msra.mxu0 0.0
    %148 = vmatpush.msra.mxu0 0.0
    %149 = vmatpush.msra.mxu0 0.0
    %150 = vmatpush.msra.mxu0 0.0
    %151 = vmatpush.msra.mxu0 0.0
    %152 = vmatpush.msra.mxu0 0.0
    %153 = vmatpush.msra.mxu0 0.0
    %154 = vmatpush.msra.mxu0 0.0
    %155 = vmatpush.msra.mxu0 0.0
    %156 = vmatpush.msra.mxu0 0.0
    %157 = vmatpush.msra.mxu0 0.0
    %158 = vmatpush.msra.mxu0 0.0
    %159 = vmatpush.msra.mxu0 0.0
    %160 = vmatpush.msra.mxu0 %v92
    %161 = vmatpush.msra.mxu0 %v91
    %162 = vmatmul.f32.gmra.mxu0 %v99
    %v163 = vpop.f32.mrf.mxu0
    %v164 = vadd.f32 %v95, %v163
    %165 = vmatmul.f32.gmra.mxu0 %v102
    %v166 = vpop.f32.mrf.mxu0
    %v167 = vadd.f32 %v95, %v166
    %168 = vmatmul.f32.gmra.mxu0 %v105
    %v169 = vpop.f32.mrf.mxu0
    %v170 = vadd.f32 %v95, %v169
    %171 = vmatmul.f32.gmra.mxu0 %v108
    %v172 = vpop.f32.mrf.mxu0
    %v173 = vadd.f32 %v95, %v172
    %174 = vmatmul.f32.gmra.mxu0 %v111
    %v175 = vpop.f32.mrf.mxu0
    %v176 = vadd.f32 %v95, %v175
    %177 = vmatmul.f32.gmra.mxu0 %v114
    %v178 = vpop.f32.mrf.mxu0
    %v179 = vadd.f32 %v95, %v178
    %180 = vmatmul.f32.gmra.mxu0 %v117
    %v181 = vpop.f32.mrf.mxu0
    %v182 = vadd.f32 %v95, %v181
    %183 = vmatmul.f32.gmra.mxu0 %v120
    %v184 = vpop.f32.mrf.mxu0
    %v185 = vadd.f32 %v95, %v184
    %186 = vmatmul.f32.gmra.mxu0 %v123
    %v187 = vpop.f32.mrf.mxu0
    %v188 = vadd.f32 %v95, %v187
    %189 = vmatmul.f32.gmra.mxu0 %v126
    %v190 = vpop.f32.mrf.mxu0
    %v191 = vadd.f32 %v95, %v190
    %192 = vmatmul.f32.gmra.mxu0 %v129
    %v193 = vpop.f32.mrf.mxu0
    %v194 = vadd.f32 %v95, %v193
    %195 = vmatmul.f32.gmra.mxu0 %v132
    %v196 = vpop.f32.mrf.mxu0
    %v197 = vadd.f32 %v95, %v196
    %198 = vmatmul.f32.gmra.mxu0 %v135
    %v199 = vpop.f32.mrf.mxu0
    %v200 = vadd.f32 %v95, %v199
    %201 = vmatmul.f32.gmra.mxu0 %v138
    %v202 = vpop.f32.mrf.mxu0
    %v203 = vadd.f32 %v95, %v202
    %204 = vmatmul.f32.gmra.mxu0 %v141
    %v205 = vpop.f32.mrf.mxu0
    %v206 = vadd.f32 %v95, %v205
    %207 = vmatmul.f32.gmra.mxu0 %v144
    %v208 = vpop.f32.mrf.mxu0
    %v209 = vadd.f32 %v95, %v208
    %210 = vdwg.mxu0
    %v211 = vmax.f32 %v164, 0.0
    %v212 = vmax.f32 %v167, 0.0
    %v213 = vmax.f32 %v170, 0.0
    %v214 = vmax.f32 %v173, 0.0
    %v215 = vmax.f32 %v176, 0.0
    %v216 = vmax.f32 %v179, 0.0
    %v217 = vmax.f32 %v182, 0.0
    %v218 = vmax.f32 %v185, 0.0
    %v219 = vmax.f32 %v188, 0.0
    %v220 = vmax.f32 %v191, 0.0
    %v221 = vmax.f32 %v194, 0.0
    %v222 = vmax.f32 %v197, 0.0
    %v223 = vmax.f32 %v200, 0.0
    %v224 = vmax.f32 %v203, 0.0
    %v225 = vmax.f32 %v206, 0.0
    %v226 = vmax.f32 %v209, 0.0
    %v227 = vld [vmem:[#allocation8] sm:$0xff]
    %v228 = vld [vmem:[#allocation8 + $0x8] sm:$0xff]
    %v229 = vld [vmem:[#allocation8 + $0x10] sm:$0xff]
    %v230 = vld [vmem:[#allocation8 + $0x18] sm:$0xff]
    %v231 = vld [vmem:[%s4] sm:$0x1]
    %v233 = vperm.slane %v231, 0
    %vm235 = vcmask 261120
    %v237 = vsel %vm235, %v211, 0
    %v240 = vsel %vm235, %v212, 0
    %v243 = vsel %vm235, %v213, 0
    %v246 = vsel %vm235, %v214, 0
    %v249 = vsel %vm235, %v215, 0
    %v252 = vsel %vm235, %v216, 0
    %v255 = vsel %vm235, %v217, 0
    %v258 = vsel %vm235, %v218, 0
    %v261 = vsel %vm235, %v219, 0
    %v264 = vsel %vm235, %v220, 0
    %v267 = vsel %vm235, %v221, 0
    %v270 = vsel %vm235, %v222, 0
    %v273 = vsel %vm235, %v223, 0
    %v276 = vsel %vm235, %v224, 0
    %v279 = vsel %vm235, %v225, 0
    %v282 = vsel %vm235, %v226, 0
    %284 = vmatpush.msra.mxu0 0.0
    %285 = vmatpush.msra.mxu0 0.0
    %286 = vmatpush.msra.mxu0 0.0
    %287 = vmatpush.msra.mxu0 0.0
    %288 = vmatpush.msra.mxu0 0.0
    %289 = vmatpush.msra.mxu0 0.0
    %290 = vmatpush.msra.mxu0 0.0
    %291 = vmatpush.msra.mxu0 0.0
    %292 = vmatpush.msra.mxu0 0.0
    %293 = vmatpush.msra.mxu0 0.0
    %294 = vmatpush.msra.mxu0 0.0
    %295 = vmatpush.msra.mxu0 0.0
    %296 = vmatpush.msra.mxu0 %v230
    %297 = vmatpush.msra.mxu0 %v229
    %298 = vmatpush.msra.mxu0 %v228
    %299 = vmatpush.msra.mxu0 %v227
    %300 = vmatmul.f32.gmra.mxu0 %v237
    %v301 = vpop.f32.mrf.mxu0
    %v302 = vadd.f32 %v233, %v301
    %303 = vmatmul.f32.gmra.mxu0 %v240
    %v304 = vpop.f32.mrf.mxu0
    %v305 = vadd.f32 %v233, %v304
    %306 = vmatmul.f32.gmra.mxu0 %v243
    %v307 = vpop.f32.mrf.mxu0
    %v308 = vadd.f32 %v233, %v307
    %309 = vmatmul.f32.gmra.mxu0 %v246
    %v310 = vpop.f32.mrf.mxu0
    %v311 = vadd.f32 %v233, %v310
    %312 = vmatmul.f32.gmra.mxu0 %v249
    %v313 = vpop.f32.mrf.mxu0
    %v314 = vadd.f32 %v233, %v313
    %315 = vmatmul.f32.gmra.mxu0 %v252
    %v316 = vpop.f32.mrf.mxu0
    %v317 = vadd.f32 %v233, %v316
    %318 = vmatmul.f32.gmra.mxu0 %v255
    %v319 = vpop.f32.mrf.mxu0
    %v320 = vadd.f32 %v233, %v319
    %321 = vmatmul.f32.gmra.mxu0 %v258
    %v322 = vpop.f32.mrf.mxu0
    %v323 = vadd.f32 %v233, %v322
    %324 = vmatmul.f32.gmra.mxu0 %v261
    %v325 = vpop.f32.mrf.mxu0
    %v326 = vadd.f32 %v233, %v325
    %327 = vmatmul.f32.gmra.mxu0 %v264
    %v328 = vpop.f32.mrf.mxu0
    %v329 = vadd.f32 %v233, %v328
    %330 = vmatmul.f32.gmra.mxu0 %v267
    %v331 = vpop.f32.mrf.mxu0
    %v332 = vadd.f32 %v233, %v331
    %333 = vmatmul.f32.gmra.mxu0 %v270
    %v334 = vpop.f32.mrf.mxu0
    %v335 = vadd.f32 %v233, %v334
    %336 = vmatmul.f32.gmra.mxu0 %v273
    %v337 = vpop.f32.mrf.mxu0
    %v338 = vadd.f32 %v233, %v337
    %339 = vmatmul.f32.gmra.mxu0 %v276
    %v340 = vpop.f32.mrf.mxu0
    %v341 = vadd.f32 %v233, %v340
    %342 = vmatmul.f32.gmra.mxu0 %v279
    %v343 = vpop.f32.mrf.mxu0
    %v344 = vadd.f32 %v233, %v343
    %345 = vmatmul.f32.gmra.mxu0 %v282
    %v346 = vpop.f32.mrf.mxu0
    %v347 = vadd.f32 %v233, %v346
    %348 = vdwg.mxu0
    %v349 = vmax.f32 %v302, 0.0
    %v350 = vmax.f32 %v305, 0.0
    %v351 = vmax.f32 %v308, 0.0
    %v352 = vmax.f32 %v311, 0.0
    %v353 = vmax.f32 %v314, 0.0
    %v354 = vmax.f32 %v317, 0.0
    %v355 = vmax.f32 %v320, 0.0
    %v356 = vmax.f32 %v323, 0.0
    %v357 = vmax.f32 %v326, 0.0
    %v358 = vmax.f32 %v329, 0.0
    %v359 = vmax.f32 %v332, 0.0
    %v360 = vmax.f32 %v335, 0.0
    %v361 = vmax.f32 %v338, 0.0
    %v362 = vmax.f32 %v341, 0.0
    %v363 = vmax.f32 %v344, 0.0
    %v364 = vmax.f32 %v347, 0.0
    %v365 = vld [vmem:[%s5] sm:$0x1]
    %v367 = vperm.slane %v365, 0
    %v369 = vmul.f32 %v349, %v367
    %v370 = vmul.f32 %v350, %v367
    %v371 = vmul.f32 %v351, %v367
    %v372 = vmul.f32 %v352, %v367
    %v373 = vmul.f32 %v353, %v367
    %v374 = vmul.f32 %v354, %v367
    %v375 = vmul.f32 %v355, %v367
    %v376 = vmul.f32 %v356, %v367
    %v377 = vmul.f32 %v357, %v367
    %v378 = vmul.f32 %v358, %v367
    %v379 = vmul.f32 %v359, %v367
    %v380 = vmul.f32 %v360, %v367
    %v381 = vmul.f32 %v361, %v367
    %v382 = vmul.f32 %v362, %v367
    %v383 = vmul.f32 %v363, %v367
    %v384 = vmul.f32 %v364, %v367
    %v385 = vsel %vm235, %v369, 0.0
    %386 = vadd.xlane.f32.xlu0 %v385
    %v387 = vpop.xlane.xlu0 %386
    %v388 = vsel %vm235, %v370, 0.0
    %389 = vadd.xlane.f32.xlu0 %v388
    %v390 = vpop.xlane.xlu0 %389
    %v391 = vsel %vm235, %v371, 0.0
    %392 = vadd.xlane.f32.xlu0 %v391
    %v393 = vpop.xlane.xlu0 %392
    %v394 = vsel %vm235, %v372, 0.0
    %395 = vadd.xlane.f32.xlu0 %v394
    %v396 = vpop.xlane.xlu0 %395
    %v397 = vsel %vm235, %v373, 0.0
    %398 = vadd.xlane.f32.xlu0 %v397
    %v399 = vpop.xlane.xlu0 %398
    %v400 = vsel %vm235, %v374, 0.0
    %401 = vadd.xlane.f32.xlu0 %v400
    %v402 = vpop.xlane.xlu0 %401
    %v403 = vsel %vm235, %v375, 0.0
    %404 = vadd.xlane.f32.xlu0 %v403
    %v405 = vpop.xlane.xlu0 %404
    %v406 = vsel %vm235, %v376, 0.0
    %407 = vadd.xlane.f32.xlu0 %v406
    %v408 = vpop.xlane.xlu0 %407
    %v409 = vsel %vm235, %v377, 0.0
    %410 = vadd.xlane.f32.xlu0 %v409
    %v411 = vpop.xlane.xlu0 %410
    %v412 = vsel %vm235, %v378, 0.0
    %413 = vadd.xlane.f32.xlu0 %v412
    %v414 = vpop.xlane.xlu0 %413
    %v415 = vsel %vm235, %v379, 0.0
    %416 = vadd.xlane.f32.xlu0 %v415
    %v417 = vpop.xlane.xlu0 %416
    %v418 = vsel %vm235, %v380, 0.0
    %419 = vadd.xlane.f32.xlu0 %v418
    %v420 = vpop.xlane.xlu0 %419
    %v421 = vsel %vm235, %v381, 0.0
    %422 = vadd.xlane.f32.xlu0 %v421
    %v423 = vpop.xlane.xlu0 %422
    %v424 = vsel %vm235, %v382, 0.0
    %425 = vadd.xlane.f32.xlu0 %v424
    %v426 = vpop.xlane.xlu0 %425
    %v427 = vsel %vm235, %v383, 0.0
    %428 = vadd.xlane.f32.xlu0 %v427
    %v429 = vpop.xlane.xlu0 %428
    %v430 = vsel %vm235, %v384, 0.0
    %431 = vadd.xlane.f32.xlu0 %v430
    %v432 = vpop.xlane.xlu0 %431
    %s433 = sld [smem:[#allocation2]]
    %v434 = vstv %s433
    %v435 = vadd.f32 %v387, %v434
    %v436 = vadd.f32 %v390, %v434
    %v437 = vadd.f32 %v393, %v434
    %v438 = vadd.f32 %v396, %v434
    %v439 = vadd.f32 %v399, %v434
    %v440 = vadd.f32 %v402, %v434
    %v441 = vadd.f32 %v405, %v434
    %v442 = vadd.f32 %v408, %v434
    %v443 = vadd.f32 %v411, %v434
    %v444 = vadd.f32 %v414, %v434
    %v445 = vadd.f32 %v417, %v434
    %v446 = vadd.f32 %v420, %v434
    %v447 = vadd.f32 %v423, %v434
    %v448 = vadd.f32 %v426, %v434
    %v449 = vadd.f32 %v429, %v434
    %v450 = vadd.f32 %v432, %v434
    %v467 = vlaneseq
    %v468 = vand.u32 %v467, 127
    %v469 = vperm.slane %v435, %v468
    %v470 = vadd.s32 %v468, 4294967288
    %v471 = vperm.slane %v436, %v470
    %vm472 = vcmask 130112
    %v473 = vsel %vm472, %v471, %v469
    %v474 = vadd.s32 %v468, 4294967280
    %v475 = vperm.slane %v437, %v474
    %vm476 = vcmask 195712
    %v477 = vsel %vm476, %v475, %v473
    %v478 = vadd.s32 %v468, 4294967272
    %v479 = vperm.slane %v438, %v478
    %vm480 = vcmask 261312
    %v481 = vsel %vm480, %v479, %v477
    %v482 = vadd.s32 %v468, 4294967264
    %v483 = vperm.slane %v439, %v482
    %vm484 = vcmask 326912
    %v485 = vsel %vm484, %v483, %v481
    %v486 = vadd.s32 %v468, 4294967256
    %v487 = vperm.slane %v440, %v486
    %vm488 = vcmask 392512
    %v489 = vsel %vm488, %v487, %v485
    %v490 = vadd.s32 %v468, 4294967248
    %v491 = vperm.slane %v441, %v490
    %vm492 = vcmask 458112
    %v493 = vsel %vm492, %v491, %v489
    %v494 = vadd.s32 %v468, 4294967240
    %v495 = vperm.slane %v442, %v494
    %vm496 = vcmask 523712
    %v497 = vsel %vm496, %v495, %v493
    %v498 = vadd.s32 %v468, 4294967232
    %v499 = vperm.slane %v443, %v498
    %vm500 = vcmask 589312
    %v501 = vsel %vm500, %v499, %v497
    %v502 = vadd.s32 %v468, 4294967224
    %v503 = vperm.slane %v444, %v502
    %vm504 = vcmask 654912
    %v505 = vsel %vm504, %v503, %v501
    %v506 = vadd.s32 %v468, 4294967216
    %v507 = vperm.slane %v445, %v506
    %vm508 = vcmask 720512
    %v509 = vsel %vm508, %v507, %v505
    %v510 = vadd.s32 %v468, 4294967208
    %v511 = vperm.slane %v446, %v510
    %vm512 = vcmask 786112
    %v513 = vsel %vm512, %v511, %v509
    %v514 = vadd.s32 %v468, 4294967200
    %v515 = vperm.slane %v447, %v514
    %vm516 = vcmask 851712
    %v517 = vsel %vm516, %v515, %v513
    %v518 = vadd.s32 %v468, 4294967192
    %v519 = vperm.slane %v448, %v518
    %vm520 = vcmask 917312
    %v521 = vsel %vm520, %v519, %v517
    %v522 = vadd.s32 %v468, 4294967184
    %v523 = vperm.slane %v449, %v522
    %vm524 = vcmask 982912
    %v525 = vsel %vm524, %v523, %v521
    %v526 = vadd.s32 %v468, 4294967176
    %v527 = vperm.slane %v450, %v526
    %vm528 = vcmask 1048512
    %v529 = vsel %vm528, %v527, %v525
    %531 = vst [vmem:[#allocation9] sm:$0x1] %v529
    // Predicated region
    $region42: #{tpu_custom_call.1} parent=1 // pred_check
      _
    $region43: #{tpu_custom_call.1} parent=1 // pred_check_branch
      %533 = sbr.rel (0) target = $region45
    $region44: #{tpu_custom_call.1} parent=1 // pred_region
      %535 = vsyncadd [#allocation5], 0
      %s537 = sshll.u32 [#allocation9], 4
      %s538 = int_to_ptr.vmem [resolvable:$true] %s537
      %s539 = sshll.u32 %s7, 4
      %s540 = int_to_ptr.hbm [resolvable:$true] %s539
      %542 = dma.vmem_to_hbm [thread:$0]  %s538, 16, %s540, [#allocation5]
    $region45: #{tpu_custom_call.1} parent=1 // pred_fallthru
      _
    // Predicated region
    $region46: #{tpu_custom_call.1} parent=1 // pred_check
      _
    $region47: #{tpu_custom_call.1} parent=1 // pred_check_branch
      %544 = sbr.rel (0) target = $region49
    $region48: #{tpu_custom_call.1} parent=1 // pred_region
      %546 = dma.done [#allocation5], 16
    $region49: #{tpu_custom_call.1} parent=1 // pred_fallthru
      _
    %547 = vsyncpa [#allocation4], 1
    %548 = vsyncpa [#allocation7], 1
    %549 = vsyncpa [#allocation5], 1

</llo_original>
